<compile_context>
chip_gen: v7x
topology: tpu7x:2x2x1
jax: 0.10.0
libtpu: 0.0.40
codegen_flags: <defaults>
</compile_context>

<pallas_src>
import jax
import jax.numpy as jnp
from jax.experimental import pallas as pl
from jax.experimental.pallas import tpu as pltpu


# ---------------------------------------------------------------------------
# route_args: faithful port of the PyTorch helper (pure Python glue)
# ---------------------------------------------------------------------------
def route_args(router, args, depth):
    routed_args = [(dict(), dict()) for _ in range(depth)]
    matched_keys = [key for key in args.keys() if key in router]
    for key in matched_keys:
        val = args[key]
        for d, ((f_args, g_args), routes) in enumerate(
            zip(routed_args, router[key])
        ):
            new_f_args, new_g_args = map(
                lambda route: {key: val} if route else {}, routes
            )
            routed_args[d] = ({**f_args, **new_f_args}, {**g_args, **new_g_args})
    return routed_args


# ---------------------------------------------------------------------------
# Pallas kernel: whole residual stack, activation tile resident across depth
#   depth d:   h = x + x@Wf[d] + bf[d] ;  x = h + h@Wg[d] + bg[d]
# ---------------------------------------------------------------------------
def fused_stack_kernel(x_ref, fw_ref, fb_ref, gw_ref, gb_ref, o_ref):
    d = pl.program_id(1)

    # Seed the resident activation from HBM x only once per M-tile.
    @pl.when(d == 0)
    def _():
        o_ref[...] = x_ref[...]

    x = o_ref[...]                                        # (tm, D) f32, resident
    # bf16 MXU operands, f32 accumulation; residual/bias adds in f32.
    h = x + jnp.dot(x.astype(jnp.bfloat16), fw_ref[...],
                    preferred_element_type=jnp.float32) + fb_ref[...]
    o_ref[...] = h + jnp.dot(h.astype(jnp.bfloat16), gw_ref[...],
                             preferred_element_type=jnp.float32) + gb_ref[...]
    # o_ref's block index is constant across the depth axis -> HBM writeback
    # happens only once, after the last depth for this M-tile.


def _pick_tm(M, align=16):
    """Row-tile size: 16-aligned (bf16 sublane packing); guarantee >=2 programs
    on the parallel M axis when M is big enough so both v7x TCs get work."""
    if M < 256:
        return max(8, -(-M // 8) * 8)          # tiny input: whole extent
    half = max(align, (M // 2) // align * align)
    return min(512, half)


def _vmem_limit_bytes():
    """Per-generation VMEM budget: ~75% of physical, capped at 96 MiB
    (128 MiB v5e/v6e -> 96 MiB; 64 MiB v7x -> 48 MiB)."""
    cap = 64 * 1024 * 1024
    try:
        info = pltpu.get_tpu_info()
        cap = int(getattr(info, "vmem_capacity_bytes", cap))
    except Exception:
        pass
    return min(int(cap * 3 // 4), 96 * 1024 * 1024)


def fused_residual_stack(x2d, fw, fb, gw, gb):
    """x2d: (M, D) f32.  fw/gw: (depth, D, D) bf16.  fb/gb: (depth, 1, D) f32."""
    M, D = x2d.shape
    depth = fw.shape[0]
    assert D % 128 == 0, (
        "dim must be a multiple of 128 (lane width); pad weights/activations "
        "once at model build time."
    )
    tm = _pick_tm(M)
    grid = (pl.cdiv(M, tm), depth)             # depth innermost (reduction-like)

    flops = depth * 4 * M * D * D              # 2 matmuls per depth, 2*M*D*D each
    bytes_accessed = (
        4 * 2 * M * D                          # x read once + out written once (f32)
        + depth * 2 * D * D * 2                # Wf, Wg per depth (bf16)
        + depth * 2 * D * 4                    # bf, bg per depth (f32)
    )

    return pl.pallas_call(
        fused_stack_kernel,
        out_shape=jax.ShapeDtypeStruct((M, D), x2d.dtype),
        grid_spec=pltpu.PrefetchScalarGridSpec(
            num_scalar_prefetch=0,
            grid=grid,
            in_specs=[
                # x tile: constant block index across depth -> fetched once per M-tile
                pl.BlockSpec((tm, D), lambda i, d: (i, 0)),
                # per-depth weights/biases (leading depth dim squeezed out)
                pl.BlockSpec((None, D, D), lambda i, d: (d, 0, 0)),   # Wf[d]
                pl.BlockSpec((None, 1, D), lambda i, d: (d, 0, 0)),   # bf[d]
                pl.BlockSpec((None, D, D), lambda i, d: (d, 0, 0)),   # Wg[d]
                pl.BlockSpec((None, 1, D), lambda i, d: (d, 0, 0)),   # bg[d]
            ],
            # constant across depth -> activation stays resident, one writeback
            out_specs=pl.BlockSpec((tm, D), lambda i, d: (i, 0)),
        ),
        compiler_params=pltpu.CompilerParams(
            dimension_semantics=("parallel", "arbitrary"),
            vmem_limit_bytes=_vmem_limit_bytes(),
        ),
        input_output_aliases={0: 0},           # update activation buffer in place
        cost_estimate=pl.CostEstimate(
            flops=flops, transcendentals=0, bytes_accessed=bytes_accessed
        ),
    )(x2d, fw, fb, gw, gb)


# ---------------------------------------------------------------------------
# SequentialSequence in JAX
# ---------------------------------------------------------------------------
@jax.jit
def _sequential_apply(params, x):
    fw, fb, gw, gb = params
    B, S, D = x.shape
    x2d = x.reshape(B * S, D)
    x2d = fused_residual_stack(x2d, fw, fb, gw, gb)   # one kernel for all depths
    return x2d.reshape(B, S, D)


class SequentialSequence:
    """layers: list of ((f_w, f_b), (g_w, g_b)) parameter pairs."""

    def __init__(self, layers, args_route={}, layer_dropout=0.0):
        assert all(
            len(route) == len(layers) for route in args_route.values()
        ), "each argument route map must have the same depth as the number of sequential layers"
        self.layers = layers
        self.args_route = args_route
        self.layer_dropout = layer_dropout  # TODO(synk): layer_dropout ignored (eval mode).

        # Stack per-depth params once; weights in bf16 (HBM + MXU), biases f32.
        fw = jnp.stack([f_w for (f_w, _), _ in layers]).astype(jnp.bfloat16)
        fb = jnp.stack([f_b for (_, f_b), _ in layers]).astype(jnp.float32)
        gw = jnp.stack([g_w for _, (g_w, _) in layers]).astype(jnp.bfloat16)
        gb = jnp.stack([g_b for _, (_, g_b) in layers]).astype(jnp.float32)
        self.params = (fw, fb, gw, gb)

    def __call__(self, x, **kwargs):
        # Argument routing is preserved for fidelity with the PyTorch module.
        # TODO(synk): routed kwargs (e.g. attention masks) are plumbed but not
        # consumed by the synthetic linear f/g sub-layers.
        _ = route_args(self.args_route, kwargs, len(self.layers))
        return _sequential_apply(self.params, x)


# ---------------------------------------------------------------------------
# Deterministic parameter init + demo
# ---------------------------------------------------------------------------
def make_layers(key, depth, dim):
    layers = []
    for _ in range(depth):
        kf_w, kf_b, kg_w, kg_b, key = jax.random.split(key, 5)
        f_w = (jax.random.normal(kf_w, (dim, dim), jnp.float32) * 0.02).astype(jnp.bfloat16)
        f_b = jax.random.normal(kf_b, (1, dim), jnp.float32) * 0.02
        g_w = (jax.random.normal(kg_w, (dim, dim), jnp.float32) * 0.02).astype(jnp.bfloat16)
        g_b = jax.random.normal(kg_b, (1, dim), jnp.float32) * 0.02
        layers.append(((f_w, f_b), (g_w, g_b)))
    return layers


if __name__ == "__main__":
    key = jax.random.PRNGKey(0)
    k_x, k_p = jax.random.split(key)

    # dim is lane-dense (multiple of 128) per perf guidance.
    batch, seq, dim, depth = 2, 8, 128, 2
    x = jax.random.normal(k_x, (batch, seq, dim), jnp.float32)

    layers = make_layers(k_p, depth, dim)
    # route an (unused-by-linear) mask kwarg to f at every depth, like dalle_pytorch
    args_route = {"mask": [(True, False)] * depth}
    model = SequentialSequence(layers, args_route=args_route)

    mask = jnp.ones((batch, seq), dtype=bool)
    out = model(x, mask=mask)
    out = jax.block_until_ready(out)

    # pure-JAX reference check (same math: bf16 matmul operands, f32 accumulate)
    fw, fb, gw, gb = model.params
    ref = x.reshape(batch * seq, dim).astype(jnp.float32)
    for d in range(depth):
        ref = ref + jnp.dot(ref.astype(jnp.bfloat16), fw[d],
                            preferred_element_type=jnp.float32) + fb[d]
        ref = ref + jnp.dot(ref.astype(jnp.bfloat16), gw[d],
                            preferred_element_type=jnp.float32) + gb[d]
    ref = ref.reshape(batch, seq, dim)
    assert jnp.allclose(out, ref, atol=1e-3, rtol=1e-3), (
        float(jnp.max(jnp.abs(out - ref)))
    )

    print("KERNEL_OK")
</pallas_src>

<mosaic_0001>
module attributes {stable_mosaic.version = 11 : i64} {
  func.func @fused_stack_kernel(%arg0: i32, %arg1: i32, %arg2: memref<16x128xf32, #tpu.memory_space<vmem>>, %arg3: memref<1x128x128xbf16, #tpu.memory_space<vmem>>, %arg4: memref<1x1x128xf32, #tpu.memory_space<vmem>>, %arg5: memref<1x128x128xbf16, #tpu.memory_space<vmem>>, %arg6: memref<1x1x128xf32, #tpu.memory_space<vmem>>, %arg7: memref<16x128xf32, #tpu.memory_space<vmem>>) attributes {dimension_semantics = [#tpu.dimension_semantics<parallel>, #tpu.dimension_semantics<arbitrary>], iteration_bounds = array<i64: 1, 2>, scalar_prefetch = 0 : i64, scratch_operands = 0 : i64, tpu.core_type = #tpu.core_type<tc>, window_params = [{transform_indices = @transform_0, window_bounds = array<i64: 16, 128>}, {transform_indices = @transform_1, window_bounds = array<i64: 1, 128, 128>}, {transform_indices = @transform_2, window_bounds = array<i64: 1, 1, 128>}, {transform_indices = @transform_3, window_bounds = array<i64: 1, 128, 128>}, {transform_indices = @transform_4, window_bounds = array<i64: 1, 1, 128>}, {transform_indices = @transform_5, window_bounds = array<i64: 16, 128>}]} {
    %c0_i32 = arith.constant 0 : i32
    %0 = arith.cmpi eq, %arg1, %c0_i32 : i32
    %1 = arith.extui %0 : i1 to i32
    %c0_i32_0 = arith.constant 0 : i32
    %2 = arith.cmpi ne, %1, %c0_i32_0 : i32
    scf.if %2 {
      %c0_17 = arith.constant 0 : index
      %c0_18 = arith.constant 0 : index
      %23 = vector.load %arg2[%c0_17, %c0_18] : memref<16x128xf32, #tpu.memory_space<vmem>>, vector<16x128xf32>
      %c0_19 = arith.constant 0 : index
      %c0_20 = arith.constant 0 : index
      %24 = vector.load %arg7[%c0_19, %c0_20] : memref<16x128xf32, #tpu.memory_space<vmem>>, vector<16x128xf32>
      tpu.vector_store %arg7[%c0_19, %c0_20], %23 {strides = array<i32>} : memref<16x128xf32, #tpu.memory_space<vmem>>, vector<16x128xf32>,
    } else {
    }
    %c0 = arith.constant 0 : index
    %c0_1 = arith.constant 0 : index
    %3 = vector.load %arg7[%c0, %c0_1] : memref<16x128xf32, #tpu.memory_space<vmem>>, vector<16x128xf32>
    %4 = arith.truncf %3 : vector<16x128xf32> to vector<16x128xbf16>
    %c0_2 = arith.constant 0 : index
    %c0_3 = arith.constant 0 : index
    %c0_4 = arith.constant 0 : index
    %5 = vector.load %arg3[%c0_2, %c0_3, %c0_4] : memref<1x128x128xbf16, #tpu.memory_space<vmem>>, vector<1x128x128xbf16>
    %6 = vector.shape_cast %5 : vector<1x128x128xbf16> to vector<128x128xbf16>
    %cst = arith.constant dense<0.000000e+00> : vector<16x128xf32>
    %7 = tpu.matmul %4, %6, %cst {dimension_numbers = #tpu.dot_dimension_numbers<[1], [0], [0], [1], [0, 0, 1, 1], [], []>} : vector<16x128xbf16>, vector<128x128xbf16>, vector<16x128xf32> -> vector<16x128xf32>
    %8 = arith.addf %3, %7 : vector<16x128xf32>
    %c0_5 = arith.constant 0 : index
    %c0_6 = arith.constant 0 : index
    %c0_7 = arith.constant 0 : index
    %9 = vector.load %arg4[%c0_5, %c0_6, %c0_7] : memref<1x1x128xf32, #tpu.memory_space<vmem>>, vector<1x1x128xf32>
    %10 = vector.shape_cast %9 : vector<1x1x128xf32> to vector<1x128xf32>
    %11 = vector.broadcast %10 : vector<1x128xf32> to vector<16x128xf32>
    %12 = arith.addf %8, %11 : vector<16x128xf32>
    %13 = arith.truncf %12 : vector<16x128xf32> to vector<16x128xbf16>
    %c0_8 = arith.constant 0 : index
    %c0_9 = arith.constant 0 : index
    %c0_10 = arith.constant 0 : index
    %14 = vector.load %arg5[%c0_8, %c0_9, %c0_10] : memref<1x128x128xbf16, #tpu.memory_space<vmem>>, vector<1x128x128xbf16>
    %15 = vector.shape_cast %14 : vector<1x128x128xbf16> to vector<128x128xbf16>
    %cst_11 = arith.constant dense<0.000000e+00> : vector<16x128xf32>
    %16 = tpu.matmul %13, %15, %cst_11 {dimension_numbers = #tpu.dot_dimension_numbers<[1], [0], [0], [1], [0, 0, 1, 1], [], []>} : vector<16x128xbf16>, vector<128x128xbf16>, vector<16x128xf32> -> vector<16x128xf32>
    %17 = arith.addf %12, %16 : vector<16x128xf32>
    %c0_12 = arith.constant 0 : index
    %c0_13 = arith.constant 0 : index
    %c0_14 = arith.constant 0 : index
    %18 = vector.load %arg6[%c0_12, %c0_13, %c0_14] : memref<1x1x128xf32, #tpu.memory_space<vmem>>, vector<1x1x128xf32>
    %19 = vector.shape_cast %18 : vector<1x1x128xf32> to vector<1x128xf32>
    %20 = vector.broadcast %19 : vector<1x128xf32> to vector<16x128xf32>
    %21 = arith.addf %17, %20 : vector<16x128xf32>
    %c0_15 = arith.constant 0 : index
    %c0_16 = arith.constant 0 : index
    %22 = vector.load %arg7[%c0_15, %c0_16] : memref<16x128xf32, #tpu.memory_space<vmem>>, vector<16x128xf32>
    tpu.vector_store %arg7[%c0_15, %c0_16], %21 {strides = array<i32>} : memref<16x128xf32, #tpu.memory_space<vmem>>, vector<16x128xf32>,
    return
  }
  func.func @transform_0(%arg0: i32, %arg1: i32) -> (i32, i32) {
    %c0_i32 = arith.constant 0 : i32
    %c0_i32_0 = arith.constant 0 : i32
    return %arg0, %c0_i32 : i32, i32
  }
  func.func @transform_1(%arg0: i32, %arg1: i32) -> (i32, i32, i32) {
    %c0_i32 = arith.constant 0 : i32
    %c0_i32_0 = arith.constant 0 : i32
    %c0_i32_1 = arith.constant 0 : i32
    return %arg1, %c0_i32, %c0_i32_0 : i32, i32, i32
  }
  func.func @transform_2(%arg0: i32, %arg1: i32) -> (i32, i32, i32) {
    %c0_i32 = arith.constant 0 : i32
    %c0_i32_0 = arith.constant 0 : i32
    %c0_i32_1 = arith.constant 0 : i32
    return %arg1, %c0_i32, %c0_i32_0 : i32, i32, i32
  }
  func.func @transform_3(%arg0: i32, %arg1: i32) -> (i32, i32, i32) {
    %c0_i32 = arith.constant 0 : i32
    %c0_i32_0 = arith.constant 0 : i32
    %c0_i32_1 = arith.constant 0 : i32
    return %arg1, %c0_i32, %c0_i32_0 : i32, i32, i32
  }
  func.func @transform_4(%arg0: i32, %arg1: i32) -> (i32, i32, i32) {
    %c0_i32 = arith.constant 0 : i32
    %c0_i32_0 = arith.constant 0 : i32
    %c0_i32_1 = arith.constant 0 : i32
    return %arg1, %c0_i32, %c0_i32_0 : i32, i32, i32
  }
  func.func @transform_5(%arg0: i32, %arg1: i32) -> (i32, i32) {
    %c0_i32 = arith.constant 0 : i32
    %c0_i32_0 = arith.constant 0 : i32
    return %arg0, %c0_i32 : i32, i32
  }
}

</mosaic_0001>

<llo_original>
// kernel: _sequential_apply.1
$region0: #{_sequential_apply.1}
  #allocation0 [shape = 'u32[]', space=smem, size = 0x4, offset = 0x4, fixed_abs, tag = 'smem constant byte address 0x4 - core index']
  #allocation1 [shape = 'u32[144,128]{1,0:T(1,128)}', space=vmem, size = 0x12000, scoped, tag = 'internal scratch']
  %s0 = inlined_call_operand.vmem [shape: f32[16,128], index: 0, kind: input, shape index: {}, may-alias: {0,5}]
  %s1 = inlined_call_operand.hbm [shape: bf16[2,128,128], index: 1, kind: input, shape index: {}]
  %s2 = inlined_call_operand.vmem [shape: f32[2,1,128], index: 2, kind: input, shape index: {}]
  %s3 = inlined_call_operand.hbm [shape: bf16[2,128,128], index: 3, kind: input, shape index: {}]
  %s4 = inlined_call_operand.vmem [shape: f32[2,1,128], index: 4, kind: input, shape index: {}]
  %s5 = inlined_call_operand.vmem [shape: f32[16,128], index: 5, kind: output, shape index: {}, may-alias: {0,5}]
  %s6 = sld [smem:[#allocation0]]
  $region65: #{_sequential_apply.1} parent=0
    _
  %s8 = ssub.s32 1, %s6
  %s9 = scalar_select 0, %s8, %s6
  $region1: #{_sequential_apply.1} parent=0
    #allocation2 [shape = 'u8[65536]{0}', space=vmem, size = 0x10000, scoped, tag = 'input window, operand 1']
    #allocation3 [shape = 's32[2]{0}', space=sflag, size = 0x8, scoped, tag = 'scoped memory for _sequential_apply.1']
    #allocation4 [shape = 'u8[65536]{0}', space=vmem, size = 0x10000, scoped, tag = 'input window, operand 3']
    #allocation5 [shape = 's32[2]{0}', space=sflag, size = 0x8, scoped, tag = 'scoped memory for _sequential_apply.1']
    %10 = vsyncpa [#allocation3], 0
    %s11 = scalar_lea.sflag [#allocation3], 1
    %12 = vsyncpa %s11, 0
    %13 = vsyncpa [#allocation5], 0
    %s14 = scalar_lea.sflag [#allocation5], 1
    %15 = vsyncpa %s14, 0
    loop: start=0, step=1, limit=4
    $region2: #{_sequential_apply.1} parent=1 // loop_pre_header
      _
    $region3: #{_sequential_apply.1} parent=1 // loop_header
      %s17 = sphi 0, %s21
      %p18 = scmp.ge.s32.totalorder %s17, 4
      %s24 = sphi 0, %s36
      %s25 = sphi 0, %s32
      %s26 = sphi 0, %s24
      %s27 = sphi 0, %s25
      %s28 = sphi 0, %s26
      %s29 = sphi 0, %s27
      %s39 = sphi 0, %s41
      %s42 = sphi 0, %s39
      %s43 = sphi 0, %s42
      %s59 = sphi 0, %s43
      %s65 = sphi 0, %s67
      %s68 = sphi 0, %s65
      %s69 = sphi 0, %s68
      %s85 = sphi 0, %s69
      %s91 = sphi 0, %s93
      %s94 = sphi 0, %s91
      %s95 = sphi 0, %s94
      %s111 = sphi 0, %s95
      %s117 = sphi 0, %s119
      %s120 = sphi 0, %s117
      %s121 = sphi 0, %s120
      %s137 = sphi 0, %s121
      %s143 = sphi 0, %s145
      %s146 = sphi 0, %s143
      %s147 = sphi 0, %s146
      %s163 = sphi 0, %s147
      %s169 = sphi 0, %s171
      %s172 = sphi 0, %s169
      %s173 = sphi 0, %s172
      %s189 = sphi 0, %s173
    $region4: #{_sequential_apply.1} parent=1 // loop_header_branch
      %20 = sbr.rel (%p18) target = $region8
    $region5: #{_sequential_apply.1} parent=1 // loop_body
      %s22 = ssub.s32 %s17, 1
      %s23 = ssub.s32 %s17, 2
      %s30 = sadd.s32 1, %s25
      %p31 = scmp.ge.s32.totalorder %s30, 2
      %s32 = scalar_select %p31, 0, %s30
      %s33 = sadd.s32 1, %s24
      %s34 = scalar_select %p31, %s33, %s24
      %p35 = scmp.ge.s32.totalorder %s34, 1
      %s36 = scalar_select %p35, 0, %s34
      %s37 = ssub.s32 %s24, %s36
      %p38 = scmp.eq.s32.totalorder %s37, 0
      %s40 = sadd.s32 %s39, 1
      %s41 = scalar_select %p38, %s39, %s40
      %p44 = pneg %p38
      %p45 = scmp.eq.s32.totalorder %s17, 1
      %p46 = por %p44, %p45
      %p47 = scmp.ne.s32.totalorder %s39, %s42
      %p48 = scmp.eq.s32.totalorder %s17, 0
      %p49 = por %p47, %p48
      %p50 = scmp.ne.s32.totalorder %s39, %s42
      %p51 = scmp.eq.s32.totalorder %s22, 1
      %p52 = por %p50, %p51
      %p53 = scmp.ne.s32.totalorder %s42, %s43
      %p54 = scmp.eq.s32.totalorder %s22, 0
      %p55 = por %p53, %p54
      %p56 = scmp.ne.s32.totalorder %s42, %s43
      %p57 = scmp.eq.s32.totalorder %s23, 1
      %p58 = por %p56, %p57
      %p60 = scmp.ne.s32.totalorder %s43, %s59
      %p61 = scmp.eq.s32.totalorder %s23, 0
      %p62 = por %p60, %p61
      %s63 = ssub.s32 %s25, %s32
      %p64 = scmp.eq.s32.totalorder %s63, 0
      %s66 = sadd.s32 %s65, 1
      %s67 = scalar_select %p64, %s65, %s66
      %p70 = pneg %p64
      %p71 = scmp.eq.s32.totalorder %s17, 1
      %p72 = por %p70, %p71
      %p73 = scmp.ne.s32.totalorder %s65, %s68
      %p74 = scmp.eq.s32.totalorder %s17, 0
      %p75 = por %p73, %p74
      %p76 = scmp.ne.s32.totalorder %s65, %s68
      %p77 = scmp.eq.s32.totalorder %s22, 1
      %p78 = por %p76, %p77
      %p79 = scmp.ne.s32.totalorder %s68, %s69
      %p80 = scmp.eq.s32.totalorder %s22, 0
      %p81 = por %p79, %p80
      %p82 = scmp.ne.s32.totalorder %s68, %s69
      %p83 = scmp.eq.s32.totalorder %s23, 1
      %p84 = por %p82, %p83
      %p86 = scmp.ne.s32.totalorder %s69, %s85
      %p87 = scmp.eq.s32.totalorder %s23, 0
      %p88 = por %p86, %p87
      %s89 = ssub.s32 %s25, %s32
      %p90 = scmp.eq.s32.totalorder %s89, 0
      %s92 = sadd.s32 %s91, 1
      %s93 = scalar_select %p90, %s91, %s92
      %p96 = pneg %p90
      %p97 = scmp.eq.s32.totalorder %s17, 1
      %p98 = por %p96, %p97
      %p99 = scmp.ne.s32.totalorder %s91, %s94
      %p100 = scmp.eq.s32.totalorder %s17, 0
      %p101 = por %p99, %p100
      %p102 = scmp.ne.s32.totalorder %s91, %s94
      %p103 = scmp.eq.s32.totalorder %s22, 1
      %p104 = por %p102, %p103
      %p105 = scmp.ne.s32.totalorder %s94, %s95
      %p106 = scmp.eq.s32.totalorder %s22, 0
      %p107 = por %p105, %p106
      %p108 = scmp.ne.s32.totalorder %s94, %s95
      %p109 = scmp.eq.s32.totalorder %s23, 1
      %p110 = por %p108, %p109
      %p112 = scmp.ne.s32.totalorder %s95, %s111
      %p113 = scmp.eq.s32.totalorder %s23, 0
      %p114 = por %p112, %p113
      %s115 = ssub.s32 %s25, %s32
      %p116 = scmp.eq.s32.totalorder %s115, 0
      %s118 = sadd.s32 %s117, 1
      %s119 = scalar_select %p116, %s117, %s118
      %p122 = pneg %p116
      %p123 = scmp.eq.s32.totalorder %s17, 1
      %p124 = por %p122, %p123
      %p125 = scmp.ne.s32.totalorder %s117, %s120
      %p126 = scmp.eq.s32.totalorder %s17, 0
      %p127 = por %p125, %p126
      %p128 = scmp.ne.s32.totalorder %s117, %s120
      %p129 = scmp.eq.s32.totalorder %s22, 1
      %p130 = por %p128, %p129
      %p131 = scmp.ne.s32.totalorder %s120, %s121
      %p132 = scmp.eq.s32.totalorder %s22, 0
      %p133 = por %p131, %p132
      %p134 = scmp.ne.s32.totalorder %s120, %s121
      %p135 = scmp.eq.s32.totalorder %s23, 1
      %p136 = por %p134, %p135
      %p138 = scmp.ne.s32.totalorder %s121, %s137
      %p139 = scmp.eq.s32.totalorder %s23, 0
      %p140 = por %p138, %p139
      %s141 = ssub.s32 %s25, %s32
      %p142 = scmp.eq.s32.totalorder %s141, 0
      %s144 = sadd.s32 %s143, 1
      %s145 = scalar_select %p142, %s143, %s144
      %p148 = pneg %p142
      %p149 = scmp.eq.s32.totalorder %s17, 1
      %p150 = por %p148, %p149
      %p151 = scmp.ne.s32.totalorder %s143, %s146
      %p152 = scmp.eq.s32.totalorder %s17, 0
      %p153 = por %p151, %p152
      %p154 = scmp.ne.s32.totalorder %s143, %s146
      %p155 = scmp.eq.s32.totalorder %s22, 1
      %p156 = por %p154, %p155
      %p157 = scmp.ne.s32.totalorder %s146, %s147
      %p158 = scmp.eq.s32.totalorder %s22, 0
      %p159 = por %p157, %p158
      %p160 = scmp.ne.s32.totalorder %s146, %s147
      %p161 = scmp.eq.s32.totalorder %s23, 1
      %p162 = por %p160, %p161
      %p164 = scmp.ne.s32.totalorder %s147, %s163
      %p165 = scmp.eq.s32.totalorder %s23, 0
      %p166 = por %p164, %p165
      %s167 = ssub.s32 %s24, %s36
      %p168 = scmp.eq.s32.totalorder %s167, 0
      %s170 = sadd.s32 %s169, 1
      %s171 = scalar_select %p168, %s169, %s170
      %p174 = pneg %p168
      %p175 = scmp.eq.s32.totalorder %s17, 1
      %p176 = por %p174, %p175
      %p177 = scmp.ne.s32.totalorder %s169, %s172
      %p178 = scmp.eq.s32.totalorder %s17, 0
      %p179 = por %p177, %p178
      %p180 = scmp.ne.s32.totalorder %s169, %s172
      %p181 = scmp.eq.s32.totalorder %s22, 1
      %p182 = por %p180, %p181
      %p183 = scmp.ne.s32.totalorder %s172, %s173
      %p184 = scmp.eq.s32.totalorder %s22, 0
      %p185 = por %p183, %p184
      %p186 = scmp.ne.s32.totalorder %s172, %s173
      %p187 = scmp.eq.s32.totalorder %s23, 1
      %p188 = por %p186, %p187
      %p190 = scmp.ne.s32.totalorder %s173, %s189
      %p191 = scmp.eq.s32.totalorder %s23, 0
      %p192 = por %p190, %p191
      %p193 = scmp.le.s32.totalorder 1, %s17
      %p194 = scmp.lt.s32.totalorder %s17, 3
      %p195 = pnand %p193, %p194
      %p196 = pneg %p195
      // Predicated region
      $region9: #{_sequential_apply.1} parent=5 // pred_check
        _
      $region10: #{_sequential_apply.1} parent=5 // pred_check_branch
        %198 = sbr.rel (%p195) target = $region12
      $region11: #{_sequential_apply.1} parent=5 // pred_region
        %s199 = ssub.s32 %s17, 1
        // Predicated region
        $region13: #{_sequential_apply.1} parent=11 // pred_check
          %p200 = pneg %p55
        $region14: #{_sequential_apply.1} parent=11 // pred_check_branch
          %202 = sbr.rel (%p200) target = $region16
        $region15: #{_sequential_apply.1} parent=11 // pred_region
          %s203 = smul.u32 2, %s26
          %p204 = scmp.lt.s32.totalorder %s203, 1
          %s205 = scalar_select %p204, %s203, 1
          %s206 = smul.addr %s205, 8
          %s207 = scalar_lea.vmem %s0, %s206
          %s208 = smul.u32 2, %s26
        $region16: #{_sequential_apply.1} parent=11 // pred_fallthru
          _
      $region12: #{_sequential_apply.1} parent=5 // pred_fallthru
        _
      %p209 = scmp.lt.s32.totalorder %s17, 2
      // Predicated region
      $region17: #{_sequential_apply.1} parent=5 // pred_check
        %p210 = pneg %p209
      $region18: #{_sequential_apply.1} parent=5 // pred_check_branch
        %212 = sbr.rel (%p210) target = $region20
      $region19: #{_sequential_apply.1} parent=5 // pred_region
        // Predicated region
        $region21: #{_sequential_apply.1} parent=19 // pred_check
          %p213 = pneg %p75
        $region22: #{_sequential_apply.1} parent=19 // pred_check_branch
          %215 = sbr.rel (%p213) target = $region24
        $region23: #{_sequential_apply.1} parent=19 // pred_region
          %s216 = sand.u32 %s65, 1
          %s217 = scalar_lea.sflag [#allocation3], %s216
          %s218 = sand.u32 %s65, 1
          %s219 = smul.addr %s218, 64
          %s220 = scalar_lea.vmem [#allocation2], %s219
          %s222 = ssub.s32 1024, 1024
          %223 = vsyncadd %s217, %s222
          %s224 = smul.addr %s25, 16
          %s225 = smul.addr %s224, 64
          %s226 = scalar_lea.hbm %s1, %s225
          %s227 = sshll.u32 %s220, 4
          %s228 = int_to_ptr.vmem [resolvable:$true] %s227
          %233 = dma.hbm_to_vmem [thread:$0]  %s226, 1024, %s228, %s217, 64, 64, 4
        $region24: #{_sequential_apply.1} parent=19 // pred_fallthru
          _
        // Predicated region
        $region25: #{_sequential_apply.1} parent=19 // pred_check
          %p234 = pneg %p101
        $region26: #{_sequential_apply.1} parent=19 // pred_check_branch
          %236 = sbr.rel (%p234) target = $region28
        $region27: #{_sequential_apply.1} parent=19 // pred_region
          %p237 = scmp.lt.s32.totalorder %s25, 1
          %s238 = scalar_select %p237, %s25, 1
          %s239 = scalar_lea.vmem %s2, %s238
        $region28: #{_sequential_apply.1} parent=19 // pred_fallthru
          _
        // Predicated region
        $region29: #{_sequential_apply.1} parent=19 // pred_check
          %p240 = pneg %p127
        $region30: #{_sequential_apply.1} parent=19 // pred_check_branch
          %242 = sbr.rel (%p240) target = $region32
        $region31: #{_sequential_apply.1} parent=19 // pred_region
          %s243 = sand.u32 %s117, 1
          %s244 = scalar_lea.sflag [#allocation5], %s243
          %s245 = sand.u32 %s117, 1
          %s246 = smul.addr %s245, 64
          %s247 = scalar_lea.vmem [#allocation4], %s246
          %s249 = ssub.s32 1024, 1024
          %250 = vsyncadd %s244, %s249
          %s251 = smul.addr %s25, 16
          %s252 = smul.addr %s251, 64
          %s253 = scalar_lea.hbm %s3, %s252
          %s254 = sshll.u32 %s247, 4
          %s255 = int_to_ptr.vmem [resolvable:$true] %s254
          %260 = dma.hbm_to_vmem [thread:$0]  %s253, 1024, %s255, %s244, 64, 64, 4
        $region32: #{_sequential_apply.1} parent=19 // pred_fallthru
          _
        // Predicated region
        $region33: #{_sequential_apply.1} parent=19 // pred_check
          %p261 = pneg %p153
        $region34: #{_sequential_apply.1} parent=19 // pred_check_branch
          %263 = sbr.rel (%p261) target = $region36
        $region35: #{_sequential_apply.1} parent=19 // pred_region
          %p264 = scmp.lt.s32.totalorder %s25, 1
          %s265 = scalar_select %p264, %s25, 1
          %s266 = scalar_lea.vmem %s4, %s265
        $region36: #{_sequential_apply.1} parent=19 // pred_fallthru
          _
      $region20: #{_sequential_apply.1} parent=5 // pred_fallthru
        _
      %p267 = scmp.le.s32.totalorder 1, %s17
      %p268 = scmp.lt.s32.totalorder %s17, 3
      %p269 = pnand %p267, %p268
      %p270 = pneg %p269
      // Predicated region
      $region37: #{_sequential_apply.1} parent=5 // pred_check
        _
      $region38: #{_sequential_apply.1} parent=5 // pred_check_branch
        %272 = sbr.rel (%p269) target = $region40
      $region39: #{_sequential_apply.1} parent=5 // pred_region
        %s273 = ssub.s32 %s17, 1
        %s274 = sand.u32 %s68, 1
        %s275 = scalar_lea.sflag [#allocation3], %s274
        %s276 = sand.u32 %s68, 1
        %s277 = smul.addr %s276, 64
        %s278 = scalar_lea.vmem [#allocation2], %s277
        // Predicated region
        $region41: #{_sequential_apply.1} parent=39 // pred_check
          %p279 = pneg %p81
        $region42: #{_sequential_apply.1} parent=39 // pred_check_branch
          %281 = sbr.rel (%p279) target = $region44
        $region43: #{_sequential_apply.1} parent=39 // pred_region
          %282 = dma.done %s275, 1024
        $region44: #{_sequential_apply.1} parent=39 // pred_fallthru
          _
        %s283 = sand.u32 %s120, 1
        %s284 = scalar_lea.sflag [#allocation5], %s283
        %s285 = sand.u32 %s120, 1
        %s286 = smul.addr %s285, 64
        %s287 = scalar_lea.vmem [#allocation4], %s286
        // Predicated region
        $region45: #{_sequential_apply.1} parent=39 // pred_check
          %p288 = pneg %p133
        $region46: #{_sequential_apply.1} parent=39 // pred_check_branch
          %290 = sbr.rel (%p288) target = $region48
        $region47: #{_sequential_apply.1} parent=39 // pred_region
          %291 = dma.done %s284, 1024
        $region48: #{_sequential_apply.1} parent=39 // pred_fallthru
          _
        %s292 = smul.u32 2, %s26
        %p293 = scmp.lt.s32.totalorder %s292, 1
        %s294 = scalar_select %p293, %s292, 1
        %s295 = smul.addr %s294, 8
        %s296 = scalar_lea.vmem %s0, %s295
        %p297 = pneg %p55
        %p298 = pneg %p52
        %s299 = sand.u32 %s68, 1
        %s300 = scalar_lea.sflag [#allocation3], %s299
        %s301 = sand.u32 %s68, 1
        %s302 = smul.addr %s301, 64
        %s303 = scalar_lea.vmem [#allocation2], %s302
        %p304 = pneg %p81
        %p305 = pneg %p78
        %p306 = scmp.lt.s32.totalorder %s27, 1
        %s307 = scalar_select %p306, %s27, 1
        %s308 = scalar_lea.vmem %s2, %s307
        %p309 = pneg %p107
        %p310 = pneg %p104
        %s311 = sand.u32 %s120, 1
        %s312 = scalar_lea.sflag [#allocation5], %s311
        %s313 = sand.u32 %s120, 1
        %s314 = smul.addr %s313, 64
        %s315 = scalar_lea.vmem [#allocation4], %s314
        %p316 = pneg %p133
        %p317 = pneg %p130
        %p318 = scmp.lt.s32.totalorder %s27, 1
        %s319 = scalar_select %p318, %s27, 1
        %s320 = scalar_lea.vmem %s4, %s319
        %p321 = pneg %p159
        %p322 = pneg %p156
        %p323 = pneg %p185
        %p324 = pneg %p182
        %s325 = smul.u32 2, %s26
        %p326 = scmp.lt.s32.totalorder %s325, 1
        %s327 = scalar_select %p326, %s325, 1
        %s328 = smul.addr %s327, 8
        %s329 = scalar_lea.vmem %s5, %s328
        %s330 = smul.u32 2, %s26
        %p331 = scmp.lt.s32.totalorder %s330, 1
        %s332 = scalar_select %p331, %s330, 1
        %s333 = smul.addr %s332, 8
        %s334 = scalar_lea.vmem %s0, %s333
        %s335 = smul.u32 2, %s26
        %p336 = scmp.lt.s32.totalorder %s27, 1
        %s337 = scalar_select %p336, %s27, 1
        %s338 = scalar_lea.vmem %s2, %s337
        %p339 = scmp.lt.s32.totalorder %s27, 1
        %s340 = scalar_select %p339, %s27, 1
        %s341 = scalar_lea.vmem %s4, %s340
        %s342 = smul.u32 2, %s26
        %p343 = scmp.lt.s32.totalorder %s342, 1
        %s344 = scalar_select %p343, %s342, 1
        %s345 = smul.addr %s344, 8
        %s346 = scalar_lea.vmem %s5, %s345
        %s347 = smul.u32 2, %s26
        %p349 = scmp.eq.s32.totalorder %s27, 0
        // Predicated region
        $region49: #{_sequential_apply.1} parent=39 // pred_check
          %p350 = pneg %p349
        $region50: #{_sequential_apply.1} parent=39 // pred_check_branch
          %352 = sbr.rel (%p350) target = $region52
        $region51: #{_sequential_apply.1} parent=39 // pred_region
          %v353 = vld [vmem:[%s334] sm:$0xff]
          %v354 = vld [vmem:[%s334 + $0x8] sm:$0xff]
          %355 = vst [vmem:[%s346] sm:$0xff] %v353
          %356 = vst [vmem:[%s346 + $0x8] sm:$0xff] %v354
        $region52: #{_sequential_apply.1} parent=39 // pred_fallthru
          _
        %v357 = vld [vmem:[%s346] sm:$0xff]
        %v358 = vld [vmem:[%s346 + $0x8] sm:$0xff]
        %v359 = vpack.c.bf16 %v358, %v357
        %v360 = vld [vmem:[%s278] sm:$0xf]
        %v361 = vld [vmem:[%s278 + $0x4] sm:$0xf]
        %v362 = vld [vmem:[%s278 + $0x8] sm:$0xf]
        %v363 = vld [vmem:[%s278 + $0xc] sm:$0xf]
        %v364 = vld [vmem:[%s278 + $0x10] sm:$0xf]
        %v365 = vld [vmem:[%s278 + $0x14] sm:$0xf]
        %v366 = vld [vmem:[%s278 + $0x18] sm:$0xf]
        %v367 = vld [vmem:[%s278 + $0x1c] sm:$0xf]
        %v368 = vld [vmem:[%s278 + $0x20] sm:$0xf]
        %v369 = vld [vmem:[%s278 + $0x24] sm:$0xf]
        %v370 = vld [vmem:[%s278 + $0x28] sm:$0xf]
        %v371 = vld [vmem:[%s278 + $0x2c] sm:$0xf]
        %v372 = vld [vmem:[%s278 + $0x30] sm:$0xf]
        %v373 = vld [vmem:[%s278 + $0x34] sm:$0xf]
        %v374 = vld [vmem:[%s278 + $0x38] sm:$0xf]
        %v375 = vld [vmem:[%s278 + $0x3c] sm:$0xf]
        %v392 = vunpack.c.l.b16 %v360
        %v393 = vunpack.c.l.b16 %v361
        %v394 = vunpack.c.l.b16 %v362
        %v395 = vunpack.c.l.b16 %v363
        %v396 = vunpack.c.l.b16 %v364
        %v397 = vunpack.c.l.b16 %v365
        %v398 = vunpack.c.l.b16 %v366
        %v399 = vunpack.c.l.b16 %v367
        %v400 = vunpack.c.l.b16 %v368
        %v401 = vunpack.c.l.b16 %v369
        %v402 = vunpack.c.l.b16 %v370
        %v403 = vunpack.c.l.b16 %v371
        %v404 = vunpack.c.l.b16 %v372
        %v405 = vunpack.c.l.b16 %v373
        %v406 = vunpack.c.l.b16 %v374
        %v407 = vunpack.c.l.b16 %v375
        %v408 = vpack.c.b16 %v393, %v392
        %v409 = vpack.c.b16 %v395, %v394
        %v410 = vpack.c.b16 %v397, %v396
        %v411 = vpack.c.b16 %v399, %v398
        %v412 = vpack.c.b16 %v401, %v400
        %v413 = vpack.c.b16 %v403, %v402
        %v414 = vpack.c.b16 %v405, %v404
        %v415 = vpack.c.b16 %v407, %v406
        %424 = vmatprep.subr.bf16.mxu0 0
        %425 = vmatpush1.bf16.msra.mxu0 %v408
        %426 = vmatprep.subr.bf16.mxu0 0
        %427 = vmatpush1.bf16.msra.mxu0 %v409
        %428 = vmatprep.subr.bf16.mxu0 0
        %429 = vmatpush1.bf16.msra.mxu0 %v410
        %430 = vmatprep.subr.bf16.mxu0 0
        %431 = vmatpush1.bf16.msra.mxu0 %v411
        %432 = vmatprep.subr.bf16.mxu0 0
        %433 = vmatpush1.bf16.msra.mxu0 %v412
        %434 = vmatprep.subr.bf16.mxu0 0
        %435 = vmatpush1.bf16.msra.mxu0 %v413
        %436 = vmatprep.subr.bf16.mxu0 0
        %437 = vmatpush1.bf16.msra.mxu0 %v414
        %438 = vmatprep.subr.bf16.mxu0 0
        %439 = vmatpush1.bf16.msra.mxu0 %v415
        %440 = vmatprep.subr.bf16.mxu0 0
        %441 = vmatpush1.bf16.msra.mxu0 0
        %442 = vmatprep.subr.bf16.mxu0 0
        %443 = vmatpush1.bf16.msra.mxu0 0
        %444 = vmatprep.subr.bf16.mxu0 0
        %445 = vmatpush1.bf16.msra.mxu0 0
        %446 = vmatprep.subr.bf16.mxu0 0
        %447 = vmatpush1.bf16.msra.mxu0 0
        %448 = vmatprep.subr.bf16.mxu0 0
        %449 = vmatpush1.bf16.msra.mxu0 0
        %450 = vmatprep.subr.bf16.mxu0 0
        %451 = vmatpush1.bf16.msra.mxu0 0
        %452 = vmatprep.subr.bf16.mxu0 0
        %453 = vmatpush1.bf16.msra.mxu0 0
        %454 = vmatprep.subr.bf16.mxu0 0
        %455 = vmatpush1.bf16.msra.mxu0 0
        %456 = vmatprep.mubr.bf16.mxu0 0
        %457 = vmatmul.mubr.bf16.gmra.mrb[0].mxu0 %v359
        %v458 = vpop.f32.mrb[0].mxu0
        %v459 = vadd.f32 0.0, %v458
        %v460 = vpop.f32.mrb[0].mxu0
        %v461 = vpop.f32.mrb[0].mxu0
        %v462 = vadd.f32 0.0, %v461
        %v463 = vpop.f32.mrb[0].mxu0
        %464 = vdwg.mxu0
        %v465 = vadd.f32 %v357, %v459
        %v466 = vadd.f32 %v358, %v462
        %v467 = vld [vmem:[%s338] sm:$0x1]
        %v469 = vlaneseq
        %v470 = vshrl.u32 %v469, 7
        %v471 = vsub.s32 0, %v470
        %v472 = vrot.slane %v467, %v471
        %v474 = vadd.f32 %v465, %v472
        %v475 = vadd.f32 %v466, %v472
        %v476 = vpack.c.bf16 %v475, %v474
        %v477 = vld [vmem:[%s287] sm:$0xf]
        %v478 = vld [vmem:[%s287 + $0x4] sm:$0xf]
        %v479 = vld [vmem:[%s287 + $0x8] sm:$0xf]
        %v480 = vld [vmem:[%s287 + $0xc] sm:$0xf]
        %v481 = vld [vmem:[%s287 + $0x10] sm:$0xf]
        %v482 = vld [vmem:[%s287 + $0x14] sm:$0xf]
        %v483 = vld [vmem:[%s287 + $0x18] sm:$0xf]
        %v484 = vld [vmem:[%s287 + $0x1c] sm:$0xf]
        %v485 = vld [vmem:[%s287 + $0x20] sm:$0xf]
        %v486 = vld [vmem:[%s287 + $0x24] sm:$0xf]
        %v487 = vld [vmem:[%s287 + $0x28] sm:$0xf]
        %v488 = vld [vmem:[%s287 + $0x2c] sm:$0xf]
        %v489 = vld [vmem:[%s287 + $0x30] sm:$0xf]
        %v490 = vld [vmem:[%s287 + $0x34] sm:$0xf]
        %v491 = vld [vmem:[%s287 + $0x38] sm:$0xf]
        %v492 = vld [vmem:[%s287 + $0x3c] sm:$0xf]
        %v509 = vunpack.c.l.b16 %v477
        %v510 = vunpack.c.l.b16 %v478
        %v511 = vunpack.c.l.b16 %v479
        %v512 = vunpack.c.l.b16 %v480
        %v513 = vunpack.c.l.b16 %v481
        %v514 = vunpack.c.l.b16 %v482
        %v515 = vunpack.c.l.b16 %v483
        %v516 = vunpack.c.l.b16 %v484
        %v517 = vunpack.c.l.b16 %v485
        %v518 = vunpack.c.l.b16 %v486
        %v519 = vunpack.c.l.b16 %v487
        %v520 = vunpack.c.l.b16 %v488
        %v521 = vunpack.c.l.b16 %v489
        %v522 = vunpack.c.l.b16 %v490
        %v523 = vunpack.c.l.b16 %v491
        %v524 = vunpack.c.l.b16 %v492
        %v525 = vpack.c.b16 %v510, %v509
        %v526 = vpack.c.b16 %v512, %v511
        %v527 = vpack.c.b16 %v514, %v513
        %v528 = vpack.c.b16 %v516, %v515
        %v529 = vpack.c.b16 %v518, %v517
        %v530 = vpack.c.b16 %v520, %v519
        %v531 = vpack.c.b16 %v522, %v521
        %v532 = vpack.c.b16 %v524, %v523
        %541 = vmatprep.subr.bf16.mxu0 0
        %542 = vmatpush1.bf16.msra.mxu0 %v525
        %543 = vmatprep.subr.bf16.mxu0 0
        %544 = vmatpush1.bf16.msra.mxu0 %v526
        %545 = vmatprep.subr.bf16.mxu0 0
        %546 = vmatpush1.bf16.msra.mxu0 %v527
        %547 = vmatprep.subr.bf16.mxu0 0
        %548 = vmatpush1.bf16.msra.mxu0 %v528
        %549 = vmatprep.subr.bf16.mxu0 0
        %550 = vmatpush1.bf16.msra.mxu0 %v529
        %551 = vmatprep.subr.bf16.mxu0 0
        %552 = vmatpush1.bf16.msra.mxu0 %v530
        %553 = vmatprep.subr.bf16.mxu0 0
        %554 = vmatpush1.bf16.msra.mxu0 %v531
        %555 = vmatprep.subr.bf16.mxu0 0
        %556 = vmatpush1.bf16.msra.mxu0 %v532
        %557 = vmatprep.subr.bf16.mxu0 0
        %558 = vmatpush1.bf16.msra.mxu0 0
        %559 = vmatprep.subr.bf16.mxu0 0
        %560 = vmatpush1.bf16.msra.mxu0 0
        %561 = vmatprep.subr.bf16.mxu0 0
        %562 = vmatpush1.bf16.msra.mxu0 0
        %563 = vmatprep.subr.bf16.mxu0 0
        %564 = vmatpush1.bf16.msra.mxu0 0
        %565 = vmatprep.subr.bf16.mxu0 0
        %566 = vmatpush1.bf16.msra.mxu0 0
        %567 = vmatprep.subr.bf16.mxu0 0
        %568 = vmatpush1.bf16.msra.mxu0 0
        %569 = vmatprep.subr.bf16.mxu0 0
        %570 = vmatpush1.bf16.msra.mxu0 0
        %571 = vmatprep.subr.bf16.mxu0 0
        %572 = vmatpush1.bf16.msra.mxu0 0
        %573 = vmatprep.mubr.bf16.mxu0 0
        %574 = vmatmul.mubr.bf16.gmra.mrb[0].mxu0 %v476
        %v575 = vpop.f32.mrb[0].mxu0
        %v576 = vadd.f32 0.0, %v575
        %v577 = vpop.f32.mrb[0].mxu0
        %v578 = vpop.f32.mrb[0].mxu0
        %v579 = vadd.f32 0.0, %v578
        %v580 = vpop.f32.mrb[0].mxu0
        %581 = vdwg.mxu0
        %v582 = vadd.f32 %v474, %v576
        %v583 = vadd.f32 %v475, %v579
        %v584 = vld [vmem:[%s341] sm:$0x1]
        %v586 = vlaneseq
        %v587 = vshrl.u32 %v586, 7
        %v588 = vsub.s32 0, %v587
        %v589 = vrot.slane %v584, %v588
        %v591 = vadd.f32 %v582, %v589
        %v592 = vadd.f32 %v583, %v589
        %593 = vst [vmem:[%s346] sm:$0xff] %v591
        %594 = vst [vmem:[%s346 + $0x8] sm:$0xff] %v592
        %s595 = smul.u32 2, %s26
        %p596 = scmp.lt.s32.totalorder %s595, 1
        %s597 = scalar_select %p596, %s595, 1
        %s598 = smul.addr %s597, 8
        %s599 = scalar_lea.vmem %s5, %s598
        // Predicated region
        $region53: #{_sequential_apply.1} parent=39 // pred_check
          %p600 = pneg %p182
        $region54: #{_sequential_apply.1} parent=39 // pred_check_branch
          %602 = sbr.rel (%p600) target = $region56
        $region55: #{_sequential_apply.1} parent=39 // pred_region
          %s603 = smul.u32 2, %s26
        $region56: #{_sequential_apply.1} parent=39 // pred_fallthru
          _
        // Predicated region
        $region57: #{_sequential_apply.1} parent=39 // pred_check
          %p604 = pneg %p182
        $region58: #{_sequential_apply.1} parent=39 // pred_check_branch
          %606 = sbr.rel (%p604) target = $region60
        $region59: #{_sequential_apply.1} parent=39 // pred_region
          %s607 = smul.u32 2, %s26
          %p608 = scmp.lt.s32.totalorder %s607, 1
          %s609 = scalar_select %p608, %s607, 1
          %s610 = smul.addr %s609, 8
          %s611 = scalar_lea.vmem %s5, %s610
        $region60: #{_sequential_apply.1} parent=39 // pred_fallthru
          _
      $region40: #{_sequential_apply.1} parent=5 // pred_fallthru
        _
      %p612 = scmp.le.s32.totalorder 2, %s17
      // Predicated region
      $region61: #{_sequential_apply.1} parent=5 // pred_check
        %p613 = pneg %p612
      $region62: #{_sequential_apply.1} parent=5 // pred_check_branch
        %615 = sbr.rel (%p613) target = $region64
      $region63: #{_sequential_apply.1} parent=5 // pred_region
        %s616 = ssub.s32 %s17, 2
      $region64: #{_sequential_apply.1} parent=5 // pred_fallthru
        _
    $region6: #{_sequential_apply.1} parent=1 // loop_footer
      %s21 = sadd.s32 1, %s17
    $region7: #{_sequential_apply.1} parent=1 // loop_footer_branch
      %16 = sbr.rel target = $region3
    $region8: #{_sequential_apply.1} parent=1 // loop_exit
      _
    %617 = vsyncpa [#allocation3], 1
    %s618 = scalar_lea.sflag [#allocation3], 1
    %619 = vsyncpa %s618, 1
    %620 = vsyncpa [#allocation5], 1
    %s621 = scalar_lea.sflag [#allocation5], 1
    %622 = vsyncpa %s621, 1

</llo_original>
